<compile_context>
chip_gen: v6e
topology: v6e:2x2x1
jax: 0.10.0
libtpu: 0.0.40
codegen_flags: <defaults>
</compile_context>

<pallas_src>
import functools

import jax
import jax.numpy as jnp
import numpy as np
from jax.experimental import pallas as pl
from jax.experimental.pallas import tpu as pltpu


def _squeeze_excite_kernel(x_ref, wa_ref, ba_ref, wb_ref, bb_ref, o_ref, *, mxu_dtype):
    """One (batch, L-tile) step: gate = sigmoid(wb @ silu(wa' @ x + ba) + bb); out = x * gate."""
    x = x_ref[0]                                   # (C, TL)
    xm = x.astype(mxu_dtype)

    # First SE 1x1 conv. The cumulative-channel-mean matrix is already folded
    # into wa' (wrapper side), so this single matmul covers cumsum/mean + conv.
    g = jnp.dot(wa_ref[...], xm, preferred_element_type=jnp.float32) + ba_ref[...]
    g = g * jax.nn.sigmoid(g)                      # SiLU (EUP)

    # Second SE 1x1 conv + sigmoid gate.
    gate = jax.nn.sigmoid(
        jnp.dot(wb_ref[...], g.astype(mxu_dtype), preferred_element_type=jnp.float32)
        + bb_ref[...])

    o_ref[0] = (x.astype(jnp.float32) * gate).astype(o_ref.dtype)


def squeeze_excite_forward(x, params, *, tl=None, mxu_dtype=jnp.float32):
    """SqueezeExcite forward. x: (B, C, L), channels-first (PyTorch NCW)."""
    B, C, L = x.shape
    H = params["wa"].shape[0]

    # Fold the cumulative mean over channels into the first conv weight:
    #   mean = cmean @ x,  wa @ mean = (wa @ cmean) @ x,
    #   cmean[i, j] = 1/(i+1) if j <= i else 0.
    row = jnp.arange(C, dtype=jnp.int32)
    cmean = (jnp.where(row[None, :] <= row[:, None], 1.0, 0.0)
             / (row[:, None].astype(jnp.float32) + 1.0))
    wa_folded = (params["wa"].astype(jnp.float32) @ cmean).astype(mxu_dtype)
    wb = params["wb"].astype(mxu_dtype)
    ba = params["ba"].astype(jnp.float32).reshape(H, 1)
    bb = params["bb"].astype(jnp.float32).reshape(C, 1)

    # L tile: lane-dense multiple of 128, sized so the per-step working set
    # (double-buffered in/out tiles + intermediates) stays far below the
    # v7x 64 MiB VMEM budget while amortizing the ~0.35us per-step overhead.
    if tl is None:
        budget = 8 * 1024 * 1024                          # activation-tile bytes per step
        tl = max(128, min(2048, (budget // (16 * C)) // 128 * 128))
    tl = min(tl, pl.cdiv(L, 128) * 128)
    lp = pl.cdiv(L, tl) * tl
    if lp != L:                                           # pad so TL divides L; sliced off below
        x = jnp.pad(x, ((0, 0), (0, 0), (0, lp - L)))

    kernel = functools.partial(_squeeze_excite_kernel, mxu_dtype=mxu_dtype)

    def const(shape):
        return pl.BlockSpec(shape, lambda b, l: (0,) * len(shape))

    out = pl.pallas_call(
        kernel,
        out_shape=jax.ShapeDtypeStruct((B, C, lp), x.dtype),
        grid_spec=pltpu.PrefetchScalarGridSpec(
            num_scalar_prefetch=0,
            grid=(B, lp // tl),
            in_specs=[
                pl.BlockSpec((1, C, tl), lambda b, l: (b, 0, l)),   # x tile
                const((H, C)), const((H, 1)),                        # folded SE conv a
                const((C, H)), const((C, 1)),                        # SE conv b
            ],
            out_specs=pl.BlockSpec((1, C, tl), lambda b, l: (b, 0, l)),
        ),
        compiler_params=pltpu.CompilerParams(
            dimension_semantics=("parallel", "parallel")),
    )(x, wa_folded, ba, wb, bb)
    return out[:, :, :L]


def init_params(key, dim, reduction_factor=4, dim_minimum=8):
    hidden = max(dim // reduction_factor, dim_minimum)

    def uni(k, shape, fan_in):
        bound = 1.0 / np.sqrt(fan_in)
        return jax.random.uniform(k, shape, jnp.float32, -bound, bound)

    ka, kba, kb, kbb = jax.random.split(key, 4)
    return dict(
        wa=uni(ka, (hidden, dim), dim),       # Conv1d(dim -> hidden, k=1)
        ba=uni(kba, (hidden,), dim),
        wb=uni(kb, (dim, hidden), hidden),    # Conv1d(hidden -> dim, k=1)
        bb=uni(kbb, (dim,), hidden),
    )


def reference_forward(x, params):
    """Pure-JAX reference matching the PyTorch SqueezeExcite module."""
    B, C, L = x.shape
    denom = jnp.arange(1, C + 1, dtype=jnp.float32)[None, :, None]
    mean = jnp.cumsum(x, axis=1) / denom
    g = jax.nn.silu(jnp.einsum("hc,bcl->bhl", params["wa"], mean)
                    + params["ba"][None, :, None])
    gate = jax.nn.sigmoid(jnp.einsum("ch,bhl->bcl", params["wb"], g)
                          + params["bb"][None, :, None])
    return x * gate


if __name__ == "__main__":
    B, C, L = 2, 16, 256     # C is sublane-aligned (multiple of 8); L gives 2 lane-dense tiles

    key = jax.random.PRNGKey(0)
    kx, kp = jax.random.split(key)
    x = jax.random.normal(kx, (B, C, L), jnp.float32)
    params = init_params(kp, C)

    ref = reference_forward(x, params)

    # f32 MXU path (tight check).
    out = squeeze_excite_forward(x, params, tl=128, mxu_dtype=jnp.float32)
    out = jax.block_until_ready(out)
    np.testing.assert_allclose(np.asarray(out), np.asarray(ref), rtol=1e-4, atol=1e-4)

    # bf16 MXU path (v6e/v7x recommendation): bf16 dot inputs, f32 accumulation.
    out_bf16 = squeeze_excite_forward(x, params, tl=128, mxu_dtype=jnp.bfloat16)
    out_bf16 = jax.block_until_ready(out_bf16)
    np.testing.assert_allclose(np.asarray(out_bf16), np.asarray(ref), rtol=5e-2, atol=5e-2)

    print("KERNEL_OK")
</pallas_src>

<mosaic_0001>
module attributes {stable_mosaic.version = 11 : i64} {
  func.func @_squeeze_excite_kernel(%arg0: i32, %arg1: i32, %arg2: memref<1x16x128xf32, #tpu.memory_space<vmem>>, %arg3: memref<8x16xf32, #tpu.memory_space<vmem>>, %arg4: memref<8x1xf32, #tpu.memory_space<vmem>>, %arg5: memref<16x8xf32, #tpu.memory_space<vmem>>, %arg6: memref<16x1xf32, #tpu.memory_space<vmem>>, %arg7: memref<1x16x128xf32, #tpu.memory_space<vmem>>) attributes {dimension_semantics = [#tpu.dimension_semantics<parallel>, #tpu.dimension_semantics<parallel>], iteration_bounds = array<i64: 2, 2>, scalar_prefetch = 0 : i64, scratch_operands = 0 : i64, tpu.core_type = #tpu.core_type<tc>, window_params = [{transform_indices = @transform_0, window_bounds = array<i64: 1, 16, 128>}, {pipeline_mode = #tpu.pipeline_mode<synchronous>, transform_indices = @transform_1, window_bounds = array<i64: 8, 16>}, {pipeline_mode = #tpu.pipeline_mode<synchronous>, transform_indices = @transform_2, window_bounds = array<i64: 8, 1>}, {pipeline_mode = #tpu.pipeline_mode<synchronous>, transform_indices = @transform_3, window_bounds = array<i64: 16, 8>}, {pipeline_mode = #tpu.pipeline_mode<synchronous>, transform_indices = @transform_4, window_bounds = array<i64: 16, 1>}, {transform_indices = @transform_5, window_bounds = array<i64: 1, 16, 128>}]} {
    %c0 = arith.constant 0 : index
    %c0_0 = arith.constant 0 : index
    %c0_1 = arith.constant 0 : index
    %0 = vector.load %arg2[%c0, %c0_0, %c0_1] : memref<1x16x128xf32, #tpu.memory_space<vmem>>, vector<1x16x128xf32>
    %1 = vector.shape_cast %0 : vector<1x16x128xf32> to vector<16x128xf32>
    %c0_2 = arith.constant 0 : index
    %c0_3 = arith.constant 0 : index
    %2 = vector.load %arg3[%c0_2, %c0_3] : memref<8x16xf32, #tpu.memory_space<vmem>>, vector<8x16xf32>
    %cst = arith.constant dense<0.000000e+00> : vector<8x128xf32>
    %3 = tpu.matmul %2, %1, %cst {dimension_numbers = #tpu.dot_dimension_numbers<[1], [0], [0], [1], [0, 0, 1, 1], [], []>} : vector<8x16xf32>, vector<16x128xf32>, vector<8x128xf32> -> vector<8x128xf32>
    %c0_4 = arith.constant 0 : index
    %c0_5 = arith.constant 0 : index
    %4 = vector.load %arg4[%c0_4, %c0_5] : memref<8x1xf32, #tpu.memory_space<vmem>>, vector<8x1xf32>
    %5 = vector.broadcast %4 : vector<8x1xf32> to vector<8x128xf32>
    %6 = arith.addf %3, %5 : vector<8x128xf32>
    %7 = arith.negf %6 : vector<8x128xf32>
    %8 = math.exp %7 : vector<8x128xf32>
    %cst_6 = arith.constant 1.000000e+00 : f32
    %9 = vector.broadcast %cst_6 : f32 to vector<8x128xf32>
    %10 = arith.addf %9, %8 : vector<8x128xf32>
    %11 = arith.divf %9, %10 : vector<8x128xf32>
    %12 = arith.mulf %6, %11 : vector<8x128xf32>
    %c0_7 = arith.constant 0 : index
    %c0_8 = arith.constant 0 : index
    %13 = vector.load %arg5[%c0_7, %c0_8] : memref<16x8xf32, #tpu.memory_space<vmem>>, vector<16x8xf32>
    %cst_9 = arith.constant dense<0.000000e+00> : vector<16x128xf32>
    %14 = tpu.matmul %13, %12, %cst_9 {dimension_numbers = #tpu.dot_dimension_numbers<[1], [0], [0], [1], [0, 0, 1, 1], [], []>} : vector<16x8xf32>, vector<8x128xf32>, vector<16x128xf32> -> vector<16x128xf32>
    %c0_10 = arith.constant 0 : index
    %c0_11 = arith.constant 0 : index
    %15 = vector.load %arg6[%c0_10, %c0_11] : memref<16x1xf32, #tpu.memory_space<vmem>>, vector<16x1xf32>
    %16 = vector.broadcast %15 : vector<16x1xf32> to vector<16x128xf32>
    %17 = arith.addf %14, %16 : vector<16x128xf32>
    %18 = arith.negf %17 : vector<16x128xf32>
    %19 = math.exp %18 : vector<16x128xf32>
    %cst_12 = arith.constant 1.000000e+00 : f32
    %20 = vector.broadcast %cst_12 : f32 to vector<16x128xf32>
    %21 = arith.addf %20, %19 : vector<16x128xf32>
    %22 = arith.divf %20, %21 : vector<16x128xf32>
    %23 = arith.mulf %1, %22 : vector<16x128xf32>
    %c0_13 = arith.constant 0 : index
    %c0_14 = arith.constant 0 : index
    %c0_15 = arith.constant 0 : index
    %24 = vector.load %arg7[%c0_13, %c0_14, %c0_15] : memref<1x16x128xf32, #tpu.memory_space<vmem>>, vector<1x16x128xf32>
    %25 = vector.shape_cast %24 : vector<1x16x128xf32> to vector<16x128xf32>
    %26 = vector.shape_cast %23 : vector<16x128xf32> to vector<1x16x128xf32>
    tpu.vector_store %arg7[%c0_13, %c0_14, %c0_15], %26 {strides = array<i32>} : memref<1x16x128xf32, #tpu.memory_space<vmem>>, vector<1x16x128xf32>,
    return
  }
  func.func @transform_0(%arg0: i32, %arg1: i32) -> (i32, i32, i32) {
    %c0_i32 = arith.constant 0 : i32
    %c0_i32_0 = arith.constant 0 : i32
    return %arg0, %c0_i32, %arg1 : i32, i32, i32
  }
  func.func @transform_1(%arg0: i32, %arg1: i32) -> (i32, i32) {
    %c0_i32 = arith.constant 0 : i32
    %c0_i32_0 = arith.constant 0 : i32
    %c0_i32_1 = arith.constant 0 : i32
    return %c0_i32, %c0_i32_0 : i32, i32
  }
  func.func @transform_2(%arg0: i32, %arg1: i32) -> (i32, i32) {
    %c0_i32 = arith.constant 0 : i32
    %c0_i32_0 = arith.constant 0 : i32
    %c0_i32_1 = arith.constant 0 : i32
    return %c0_i32, %c0_i32_0 : i32, i32
  }
  func.func @transform_3(%arg0: i32, %arg1: i32) -> (i32, i32) {
    %c0_i32 = arith.constant 0 : i32
    %c0_i32_0 = arith.constant 0 : i32
    %c0_i32_1 = arith.constant 0 : i32
    return %c0_i32, %c0_i32_0 : i32, i32
  }
  func.func @transform_4(%arg0: i32, %arg1: i32) -> (i32, i32) {
    %c0_i32 = arith.constant 0 : i32
    %c0_i32_0 = arith.constant 0 : i32
    %c0_i32_1 = arith.constant 0 : i32
    return %c0_i32, %c0_i32_0 : i32, i32
  }
  func.func @transform_5(%arg0: i32, %arg1: i32) -> (i32, i32, i32) {
    %c0_i32 = arith.constant 0 : i32
    %c0_i32_0 = arith.constant 0 : i32
    return %arg0, %c0_i32, %arg1 : i32, i32, i32
  }
}

</mosaic_0001>

<llo_original>
// kernel: tpu_custom_call.1
$region0: #{tpu_custom_call.1}
  #allocation0 [shape = 'u32[]', space=smem, size = 0x4, offset = 0x4, fixed_abs, tag = 'smem constant byte address 0x4 - core index']
  #allocation1 [shape = 'u32[144,128]{1,0:T(1,128)}', space=vmem, size = 0x12000, scoped, tag = 'internal scratch']
  %s0 = inlined_call_operand.hbm [shape: f32[2,16,256], index: 0, kind: input, shape index: {}]
  %s1 = inlined_call_operand.vmem [shape: f32[8,16], index: 1, kind: input, shape index: {}]
  %s2 = inlined_call_operand.vmem [shape: f32[8,1], index: 2, kind: input, shape index: {}]
  %s3 = inlined_call_operand.vmem [shape: f32[16,8], index: 3, kind: input, shape index: {}]
  %s4 = inlined_call_operand.vmem [shape: f32[16,1], index: 4, kind: input, shape index: {}]
  %s5 = inlined_call_operand.hbm [shape: f32[2,16,256], index: 5, kind: output, shape index: {}]
  %s6 = sld [smem:[#allocation0]]
  $region57: #{tpu_custom_call.1} parent=0
    _
  %s8 = ssub.s32 1, %s6
  %s9 = scalar_select 0, %s8, %s6
  $region1: #{tpu_custom_call.1} parent=0
    #allocation2 [shape = 'u8[16384]{0}', space=vmem, size = 0x4000, scoped, tag = 'input window, operand 0']
    #allocation3 [shape = 's32[2]{0}', space=sflag, size = 0x8, scoped, tag = 'scoped memory for tpu_custom_call.1']
    #allocation4 [shape = 's32[2]{0}', space=sflag, size = 0x8, scoped, tag = 'scoped memory for tpu_custom_call.1']
    #allocation5 [shape = 'u8[16384]{0}', space=vmem, size = 0x4000, scoped, tag = 'output window, operand 0']
    %10 = vsyncpa [#allocation3], 0
    %s11 = scalar_lea.sflag [#allocation3], 1
    %12 = vsyncpa %s11, 0
    %13 = vsyncpa [#allocation4], 0
    %s14 = scalar_lea.sflag [#allocation4], 1
    %15 = vsyncpa %s14, 0
    loop: start=0, step=1, limit=6
    $region2: #{tpu_custom_call.1} parent=1 // loop_pre_header
      _
    $region3: #{tpu_custom_call.1} parent=1 // loop_header
      %s17 = sphi 0, %s21
      %p18 = scmp.ge.s32.totalorder %s17, 6
      %s24 = sphi 0, %s36
      %s25 = sphi 0, %s32
      %s26 = sphi 0, %s24
      %s27 = sphi 0, %s25
      %s28 = sphi 0, %s26
      %s29 = sphi 0, %s27
      %s41 = sphi 0, %s43
      %s44 = sphi 0, %s41
      %s45 = sphi 0, %s44
      %s61 = sphi 0, %s45
      %s65 = sphi 0, %s65
      %s67 = sphi 0, %s65
      %s68 = sphi 0, %s67
      %s82 = sphi 0, %s68
      %s86 = sphi 0, %s86
      %s88 = sphi 0, %s86
      %s89 = sphi 0, %s88
      %s103 = sphi 0, %s89
      %s107 = sphi 0, %s107
      %s109 = sphi 0, %s107
      %s110 = sphi 0, %s109
      %s124 = sphi 0, %s110
      %s128 = sphi 0, %s128
      %s130 = sphi 0, %s128
      %s131 = sphi 0, %s130
      %s145 = sphi 0, %s131
      %s153 = sphi 0, %s155
      %s156 = sphi 0, %s153
      %s157 = sphi 0, %s156
      %s173 = sphi 0, %s157
    $region4: #{tpu_custom_call.1} parent=1 // loop_header_branch
      %20 = sbr.rel (%p18) target = $region8
    $region5: #{tpu_custom_call.1} parent=1 // loop_body
      %s22 = ssub.s32 %s17, 1
      %s23 = ssub.s32 %s17, 2
      %s30 = sadd.s32 1, %s25
      %p31 = scmp.ge.s32.totalorder %s30, 2
      %s32 = scalar_select %p31, 0, %s30
      %s33 = sadd.s32 1, %s24
      %s34 = scalar_select %p31, %s33, %s24
      %p35 = scmp.ge.s32.totalorder %s34, 2
      %s36 = scalar_select %p35, 0, %s34
      %s37 = ssub.s32 %s24, %s36
      %s38 = ssub.s32 %s25, %s32
      %s39 = sor.u32 %s37, %s38
      %p40 = scmp.eq.s32.totalorder %s39, 0
      %s42 = sadd.s32 %s41, 1
      %s43 = scalar_select %p40, %s41, %s42
      %p46 = pneg %p40
      %p47 = scmp.eq.s32.totalorder %s17, 3
      %p48 = por %p46, %p47
      %p49 = scmp.ne.s32.totalorder %s41, %s44
      %p50 = scmp.eq.s32.totalorder %s17, 0
      %p51 = por %p49, %p50
      %p52 = scmp.ne.s32.totalorder %s41, %s44
      %p53 = scmp.eq.s32.totalorder %s22, 3
      %p54 = por %p52, %p53
      %p55 = scmp.ne.s32.totalorder %s44, %s45
      %p56 = scmp.eq.s32.totalorder %s22, 0
      %p57 = por %p55, %p56
      %p58 = scmp.ne.s32.totalorder %s44, %s45
      %p59 = scmp.eq.s32.totalorder %s23, 3
      %p60 = por %p58, %p59
      %p62 = scmp.ne.s32.totalorder %s45, %s61
      %p63 = scmp.eq.s32.totalorder %s23, 0
      %p64 = por %p62, %p63
      %s66 = sadd.s32 %s65, 1
      %p69 = scmp.eq.s32.totalorder %s17, 3
      %p70 = scmp.ne.s32.totalorder %s65, %s67
      %p71 = scmp.eq.s32.totalorder %s17, 0
      %p72 = por %p70, %p71
      %p73 = scmp.ne.s32.totalorder %s65, %s67
      %p74 = scmp.eq.s32.totalorder %s22, 3
      %p75 = por %p73, %p74
      %p76 = scmp.ne.s32.totalorder %s67, %s68
      %p77 = scmp.eq.s32.totalorder %s22, 0
      %p78 = por %p76, %p77
      %p79 = scmp.ne.s32.totalorder %s67, %s68
      %p80 = scmp.eq.s32.totalorder %s23, 3
      %p81 = por %p79, %p80
      %p83 = scmp.ne.s32.totalorder %s68, %s82
      %p84 = scmp.eq.s32.totalorder %s23, 0
      %p85 = por %p83, %p84
      %s87 = sadd.s32 %s86, 1
      %p90 = scmp.eq.s32.totalorder %s17, 3
      %p91 = scmp.ne.s32.totalorder %s86, %s88
      %p92 = scmp.eq.s32.totalorder %s17, 0
      %p93 = por %p91, %p92
      %p94 = scmp.ne.s32.totalorder %s86, %s88
      %p95 = scmp.eq.s32.totalorder %s22, 3
      %p96 = por %p94, %p95
      %p97 = scmp.ne.s32.totalorder %s88, %s89
      %p98 = scmp.eq.s32.totalorder %s22, 0
      %p99 = por %p97, %p98
      %p100 = scmp.ne.s32.totalorder %s88, %s89
      %p101 = scmp.eq.s32.totalorder %s23, 3
      %p102 = por %p100, %p101
      %p104 = scmp.ne.s32.totalorder %s89, %s103
      %p105 = scmp.eq.s32.totalorder %s23, 0
      %p106 = por %p104, %p105
      %s108 = sadd.s32 %s107, 1
      %p111 = scmp.eq.s32.totalorder %s17, 3
      %p112 = scmp.ne.s32.totalorder %s107, %s109
      %p113 = scmp.eq.s32.totalorder %s17, 0
      %p114 = por %p112, %p113
      %p115 = scmp.ne.s32.totalorder %s107, %s109
      %p116 = scmp.eq.s32.totalorder %s22, 3
      %p117 = por %p115, %p116
      %p118 = scmp.ne.s32.totalorder %s109, %s110
      %p119 = scmp.eq.s32.totalorder %s22, 0
      %p120 = por %p118, %p119
      %p121 = scmp.ne.s32.totalorder %s109, %s110
      %p122 = scmp.eq.s32.totalorder %s23, 3
      %p123 = por %p121, %p122
      %p125 = scmp.ne.s32.totalorder %s110, %s124
      %p126 = scmp.eq.s32.totalorder %s23, 0
      %p127 = por %p125, %p126
      %s129 = sadd.s32 %s128, 1
      %p132 = scmp.eq.s32.totalorder %s17, 3
      %p133 = scmp.ne.s32.totalorder %s128, %s130
      %p134 = scmp.eq.s32.totalorder %s17, 0
      %p135 = por %p133, %p134
      %p136 = scmp.ne.s32.totalorder %s128, %s130
      %p137 = scmp.eq.s32.totalorder %s22, 3
      %p138 = por %p136, %p137
      %p139 = scmp.ne.s32.totalorder %s130, %s131
      %p140 = scmp.eq.s32.totalorder %s22, 0
      %p141 = por %p139, %p140
      %p142 = scmp.ne.s32.totalorder %s130, %s131
      %p143 = scmp.eq.s32.totalorder %s23, 3
      %p144 = por %p142, %p143
      %p146 = scmp.ne.s32.totalorder %s131, %s145
      %p147 = scmp.eq.s32.totalorder %s23, 0
      %p148 = por %p146, %p147
      %s149 = ssub.s32 %s24, %s36
      %s150 = ssub.s32 %s25, %s32
      %s151 = sor.u32 %s149, %s150
      %p152 = scmp.eq.s32.totalorder %s151, 0
      %s154 = sadd.s32 %s153, 1
      %s155 = scalar_select %p152, %s153, %s154
      %p158 = pneg %p152
      %p159 = scmp.eq.s32.totalorder %s17, 3
      %p160 = por %p158, %p159
      %p161 = scmp.ne.s32.totalorder %s153, %s156
      %p162 = scmp.eq.s32.totalorder %s17, 0
      %p163 = por %p161, %p162
      %p164 = scmp.ne.s32.totalorder %s153, %s156
      %p165 = scmp.eq.s32.totalorder %s22, 3
      %p166 = por %p164, %p165
      %p167 = scmp.ne.s32.totalorder %s156, %s157
      %p168 = scmp.eq.s32.totalorder %s22, 0
      %p169 = por %p167, %p168
      %p170 = scmp.ne.s32.totalorder %s156, %s157
      %p171 = scmp.eq.s32.totalorder %s23, 3
      %p172 = por %p170, %p171
      %p174 = scmp.ne.s32.totalorder %s157, %s173
      %p175 = scmp.eq.s32.totalorder %s23, 0
      %p176 = por %p174, %p175
      %p177 = scmp.le.s32.totalorder 1, %s17
      %p178 = scmp.lt.s32.totalorder %s17, 5
      %p179 = pnand %p177, %p178
      %p180 = pneg %p179
      // Predicated region
      $region9: #{tpu_custom_call.1} parent=5 // pred_check
        _
      $region10: #{tpu_custom_call.1} parent=5 // pred_check_branch
        %182 = sbr.rel (%p179) target = $region12
      $region11: #{tpu_custom_call.1} parent=5 // pred_region
        %s183 = ssub.s32 %s17, 1
        // Predicated region
        $region13: #{tpu_custom_call.1} parent=11 // pred_check
          %p184 = pneg %p78
        $region14: #{tpu_custom_call.1} parent=11 // pred_check_branch
          %186 = sbr.rel (%p184) target = $region16
        $region15: #{tpu_custom_call.1} parent=11 // pred_region
          _
        $region16: #{tpu_custom_call.1} parent=11 // pred_fallthru
          _
        // Predicated region
        $region17: #{tpu_custom_call.1} parent=11 // pred_check
          %p187 = pneg %p99
        $region18: #{tpu_custom_call.1} parent=11 // pred_check_branch
          %189 = sbr.rel (%p187) target = $region20
        $region19: #{tpu_custom_call.1} parent=11 // pred_region
          _
        $region20: #{tpu_custom_call.1} parent=11 // pred_fallthru
          _
        // Predicated region
        $region21: #{tpu_custom_call.1} parent=11 // pred_check
          %p190 = pneg %p120
        $region22: #{tpu_custom_call.1} parent=11 // pred_check_branch
          %192 = sbr.rel (%p190) target = $region24
        $region23: #{tpu_custom_call.1} parent=11 // pred_region
          _
        $region24: #{tpu_custom_call.1} parent=11 // pred_fallthru
          _
        // Predicated region
        $region25: #{tpu_custom_call.1} parent=11 // pred_check
          %p193 = pneg %p141
        $region26: #{tpu_custom_call.1} parent=11 // pred_check_branch
          %195 = sbr.rel (%p193) target = $region28
        $region27: #{tpu_custom_call.1} parent=11 // pred_region
          _
        $region28: #{tpu_custom_call.1} parent=11 // pred_fallthru
          _
      $region12: #{tpu_custom_call.1} parent=5 // pred_fallthru
        _
      %p196 = scmp.lt.s32.totalorder %s17, 4
      // Predicated region
      $region29: #{tpu_custom_call.1} parent=5 // pred_check
        %p197 = pneg %p196
      $region30: #{tpu_custom_call.1} parent=5 // pred_check_branch
        %199 = sbr.rel (%p197) target = $region32
      $region31: #{tpu_custom_call.1} parent=5 // pred_region
        // Predicated region
        $region33: #{tpu_custom_call.1} parent=31 // pred_check
          %p200 = pneg %p51
        $region34: #{tpu_custom_call.1} parent=31 // pred_check_branch
          %202 = sbr.rel (%p200) target = $region36
        $region35: #{tpu_custom_call.1} parent=31 // pred_region
          %s203 = sand.u32 %s41, 1
          %s204 = scalar_lea.sflag [#allocation3], %s203
          %s205 = sand.u32 %s41, 1
          %s206 = smul.addr %s205, 16
          %s207 = scalar_lea.vmem [#allocation2], %s206
          %s209 = ssub.s32 256, 256
          %210 = vsyncadd %s204, %s209
          %s211 = smul.addr %s24, 4
          %s212 = sadd.s32 %s25, %s211
          %s213 = smul.addr %s212, 128
          %s214 = scalar_lea.hbm %s0, %s213
          %s215 = sshll.u32 %s207, 4
          %s216 = int_to_ptr.vmem [resolvable:$true] %s215
          %221 = dma.hbm_to_vmem [thread:$0]  %s214, 256, %s216, %s204, 256, 128, 8
        $region36: #{tpu_custom_call.1} parent=31 // pred_fallthru
          _
      $region32: #{tpu_custom_call.1} parent=5 // pred_fallthru
        _
      %p222 = scmp.le.s32.totalorder 1, %s17
      %p223 = scmp.lt.s32.totalorder %s17, 5
      %p224 = pnand %p222, %p223
      %p225 = pneg %p224
      // Predicated region
      $region37: #{tpu_custom_call.1} parent=5 // pred_check
        _
      $region38: #{tpu_custom_call.1} parent=5 // pred_check_branch
        %227 = sbr.rel (%p224) target = $region40
      $region39: #{tpu_custom_call.1} parent=5 // pred_region
        %s228 = ssub.s32 %s17, 1
        %s229 = sand.u32 %s44, 1
        %s230 = scalar_lea.sflag [#allocation3], %s229
        %s231 = sand.u32 %s44, 1
        %s232 = smul.addr %s231, 16
        %s233 = scalar_lea.vmem [#allocation2], %s232
        // Predicated region
        $region41: #{tpu_custom_call.1} parent=39 // pred_check
          %p234 = pneg %p57
        $region42: #{tpu_custom_call.1} parent=39 // pred_check_branch
          %236 = sbr.rel (%p234) target = $region44
        $region43: #{tpu_custom_call.1} parent=39 // pred_region
          %237 = dma.done %s230, 256
        $region44: #{tpu_custom_call.1} parent=39 // pred_fallthru
          _
        %s238 = sand.u32 %s44, 1
        %s239 = scalar_lea.sflag [#allocation3], %s238
        %s240 = sand.u32 %s44, 1
        %s241 = smul.addr %s240, 16
        %s242 = scalar_lea.vmem [#allocation2], %s241
        %p243 = pneg %p57
        %p244 = pneg %p54
        %p245 = pneg %p78
        %p246 = pneg %p75
        %p247 = pneg %p99
        %p248 = pneg %p96
        %p249 = pneg %p120
        %p250 = pneg %p117
        %p251 = pneg %p141
        %p252 = pneg %p138
        %p253 = pneg %p169
        %p254 = pneg %p166
        %s255 = sand.u32 %s156, 1
        %s256 = scalar_lea.sflag [#allocation4], %s255
        %s257 = sand.u32 %s156, 1
        %s258 = smul.addr %s257, 16
        %s259 = scalar_lea.vmem [#allocation5], %s258
        %v260 = vld [vmem:[%s233] sm:$0xff]
        %v261 = vld [vmem:[%s233 + $0x8] sm:$0xff]
        %v262 = vld [vmem:[%s1] sm:$0xff]
        %v263 = vld [vmem:[%s2] sm:$0xff]
        %265 = vset.pattern.permute.xlu0 0
        %266 = vperm.xlu0 %265, %v263
        %v267 = vpop.permute.xlu0 %266
        %vm269 = vcmask 130048
        %v271 = vsel %vm269, %v262, 0
        %273 = vmatprep.subr.mxu0 0.0
        %274 = vmatpush1.msra.mxu0 0.0
        %275 = vmatprep.subr.mxu0 0.0
        %276 = vmatpush1.msra.mxu0 0.0
        %277 = vmatprep.subr.mxu0 0.0
        %278 = vmatpush1.msra.mxu0 0.0
        %279 = vmatprep.subr.mxu0 0.0
        %280 = vmatpush1.msra.mxu0 0.0
        %281 = vmatprep.subr.mxu0 0.0
        %282 = vmatpush1.msra.mxu0 0.0
        %283 = vmatprep.subr.mxu0 0.0
        %284 = vmatpush1.msra.mxu0 0.0
        %285 = vmatprep.subr.mxu0 0.0
        %286 = vmatpush1.msra.mxu0 0.0
        %287 = vmatprep.subr.mxu0 0.0
        %288 = vmatpush1.msra.mxu0 0.0
        %289 = vmatprep.subr.mxu0 0.0
        %290 = vmatpush1.msra.mxu0 0.0
        %291 = vmatprep.subr.mxu0 0.0
        %292 = vmatpush1.msra.mxu0 0.0
        %293 = vmatprep.subr.mxu0 0.0
        %294 = vmatpush1.msra.mxu0 0.0
        %295 = vmatprep.subr.mxu0 0.0
        %296 = vmatpush1.msra.mxu0 0.0
        %297 = vmatprep.subr.mxu0 0.0
        %298 = vmatpush1.msra.mxu0 0.0
        %299 = vmatprep.subr.mxu0 0.0
        %300 = vmatpush1.msra.mxu0 0.0
        %301 = vmatprep.subr.mxu0 0.0
        %302 = vmatpush1.msra.mxu0 %v261
        %303 = vmatprep.subr.mxu0 0.0
        %304 = vmatpush1.msra.mxu0 %v260
        %305 = vmatprep.subr.mxu0 0.0
        %306 = vmatpush2.msra.mxu0 0.0
        %307 = vmatprep.subr.mxu0 0.0
        %308 = vmatpush2.msra.mxu0 0.0
        %309 = vmatprep.subr.mxu0 0.0
        %310 = vmatpush2.msra.mxu0 0.0
        %311 = vmatprep.subr.mxu0 0.0
        %312 = vmatpush2.msra.mxu0 0.0
        %313 = vmatprep.subr.mxu0 0.0
        %314 = vmatpush2.msra.mxu0 0.0
        %315 = vmatprep.subr.mxu0 0.0
        %316 = vmatpush2.msra.mxu0 0.0
        %317 = vmatprep.subr.mxu0 0.0
        %318 = vmatpush2.msra.mxu0 0.0
        %319 = vmatprep.subr.mxu0 0.0
        %320 = vmatpush2.msra.mxu0 0.0
        %321 = vmatprep.subr.mxu0 0.0
        %322 = vmatpush2.msra.mxu0 0.0
        %323 = vmatprep.subr.mxu0 0.0
        %324 = vmatpush2.msra.mxu0 0.0
        %325 = vmatprep.subr.mxu0 0.0
        %326 = vmatpush2.msra.mxu0 0.0
        %327 = vmatprep.subr.mxu0 0.0
        %328 = vmatpush2.msra.mxu0 0.0
        %329 = vmatprep.subr.mxu0 0.0
        %330 = vmatpush2.msra.mxu0 0.0
        %331 = vmatprep.subr.mxu0 0.0
        %332 = vmatpush2.msra.mxu0 0.0
        %333 = vmatprep.subr.mxu0 0.0
        %334 = vmatpush2.msra.mxu0 0.0
        %335 = vmatprep.subr.mxu0 0.0
        %336 = vmatpush2.msra.mxu0 0.0
        %337 = vmatprep.mubr.f32.mxu0 0.0
        %338 = vmatmul.mubr.f32.gmra.mxu0 %v271
        %v339 = vpop.f32.mrf.mxu0
        %v340 = vadd.f32 %v267, %v339
        %v341 = vpop.f32.mrf.mxu0
        %342 = vdwg.mxu0
        %v343 = vxor.u32 %v340, 2147483648
        %v344 = vmul.f32 %v343, 1.442695
        %v345 = vpow.pop %v344
        %v346 = vadd.f32 %v345, 1.0
        %v347 = vrcp.pop %v346
        %v348 = vmul.f32 1.0, %v347
        %v349 = vmul.f32 %v340, %v348
        %v350 = vld [vmem:[%s3] sm:$0xff]
        %v351 = vld [vmem:[%s3 + $0x8] sm:$0xff]
        %v352 = vld [vmem:[%s4] sm:$0xff]
        %v353 = vld [vmem:[%s4 + $0x8] sm:$0xff]
        %355 = vset.pattern.permute.xlu0 0
        %356 = vperm.xlu0 %355, %v352
        %v357 = vpop.permute.xlu0 %356
        %360 = vset.pattern.permute.xlu0 0
        %361 = vperm.xlu0 %360, %v353
        %v362 = vpop.permute.xlu0 %361
        %vm364 = vcmask 64512
        %v366 = vsel %vm364, %v350, 0
        %v369 = vsel %vm364, %v351, 0
        %371 = vmatprep.subr.mxu0 0.0
        %372 = vmatpush1.msra.mxu0 0.0
        %373 = vmatprep.subr.mxu0 0.0
        %374 = vmatpush1.msra.mxu0 0.0
        %375 = vmatprep.subr.mxu0 0.0
        %376 = vmatpush1.msra.mxu0 0.0
        %377 = vmatprep.subr.mxu0 0.0
        %378 = vmatpush1.msra.mxu0 0.0
        %379 = vmatprep.subr.mxu0 0.0
        %380 = vmatpush1.msra.mxu0 0.0
        %381 = vmatprep.subr.mxu0 0.0
        %382 = vmatpush1.msra.mxu0 0.0
        %383 = vmatprep.subr.mxu0 0.0
        %384 = vmatpush1.msra.mxu0 0.0
        %385 = vmatprep.subr.mxu0 0.0
        %386 = vmatpush1.msra.mxu0 0.0
        %387 = vmatprep.subr.mxu0 0.0
        %388 = vmatpush1.msra.mxu0 0.0
        %389 = vmatprep.subr.mxu0 0.0
        %390 = vmatpush1.msra.mxu0 0.0
        %391 = vmatprep.subr.mxu0 0.0
        %392 = vmatpush1.msra.mxu0 0.0
        %393 = vmatprep.subr.mxu0 0.0
        %394 = vmatpush1.msra.mxu0 0.0
        %395 = vmatprep.subr.mxu0 0.0
        %396 = vmatpush1.msra.mxu0 0.0
        %397 = vmatprep.subr.mxu0 0.0
        %398 = vmatpush1.msra.mxu0 0.0
        %399 = vmatprep.subr.mxu0 0.0
        %400 = vmatpush1.msra.mxu0 0.0
        %401 = vmatprep.subr.mxu0 0.0
        %402 = vmatpush1.msra.mxu0 %v349
        %403 = vmatprep.subr.mxu0 0.0
        %404 = vmatpush2.msra.mxu0 0.0
        %405 = vmatprep.subr.mxu0 0.0
        %406 = vmatpush2.msra.mxu0 0.0
        %407 = vmatprep.subr.mxu0 0.0
        %408 = vmatpush2.msra.mxu0 0.0
        %409 = vmatprep.subr.mxu0 0.0
        %410 = vmatpush2.msra.mxu0 0.0
        %411 = vmatprep.subr.mxu0 0.0
        %412 = vmatpush2.msra.mxu0 0.0
        %413 = vmatprep.subr.mxu0 0.0
        %414 = vmatpush2.msra.mxu0 0.0
        %415 = vmatprep.subr.mxu0 0.0
        %416 = vmatpush2.msra.mxu0 0.0
        %417 = vmatprep.subr.mxu0 0.0
        %418 = vmatpush2.msra.mxu0 0.0
        %419 = vmatprep.subr.mxu0 0.0
        %420 = vmatpush2.msra.mxu0 0.0
        %421 = vmatprep.subr.mxu0 0.0
        %422 = vmatpush2.msra.mxu0 0.0
        %423 = vmatprep.subr.mxu0 0.0
        %424 = vmatpush2.msra.mxu0 0.0
        %425 = vmatprep.subr.mxu0 0.0
        %426 = vmatpush2.msra.mxu0 0.0
        %427 = vmatprep.subr.mxu0 0.0
        %428 = vmatpush2.msra.mxu0 0.0
        %429 = vmatprep.subr.mxu0 0.0
        %430 = vmatpush2.msra.mxu0 0.0
        %431 = vmatprep.subr.mxu0 0.0
        %432 = vmatpush2.msra.mxu0 0.0
        %433 = vmatprep.subr.mxu0 0.0
        %434 = vmatpush2.msra.mxu0 0.0
        %435 = vmatprep.mubr.f32.mxu0 0.0
        %436 = vmatmul.mubr.f32.gmra.mxu0 %v366
        %v437 = vpop.f32.mrf.mxu0
        %v438 = vadd.f32 %v357, %v437
        %v439 = vpop.f32.mrf.mxu0
        %440 = vmatprep.mubr.f32.mxu0 0.0
        %441 = vmatmul.mubr.f32.gmra.mxu0 %v369
        %v442 = vpop.f32.mrf.mxu0
        %v443 = vadd.f32 %v362, %v442
        %v444 = vpop.f32.mrf.mxu0
        %445 = vdwg.mxu0
        %v446 = vxor.u32 %v438, 2147483648
        %v447 = vxor.u32 %v443, 2147483648
        %v448 = vmul.f32 %v446, 1.442695
        %v449 = vpow.pop %v448
        %v450 = vmul.f32 %v447, 1.442695
        %v451 = vpow.pop %v450
        %v452 = vadd.f32 %v449, 1.0
        %v453 = vadd.f32 %v451, 1.0
        %v454 = vrcp.pop %v452
        %v455 = vmul.f32 1.0, %v454
        %v456 = vrcp.pop %v453
        %v457 = vmul.f32 1.0, %v456
        %v458 = vmul.f32 %v260, %v455
        %v459 = vmul.f32 %v261, %v457
        %460 = vst [vmem:[%s259] sm:$0xff] %v458
        %461 = vst [vmem:[%s259 + $0x8] sm:$0xff] %v459
        %s462 = sand.u32 %s156, 1
        %s463 = scalar_lea.sflag [#allocation4], %s462
        %s464 = sand.u32 %s156, 1
        %s465 = smul.addr %s464, 16
        %s466 = scalar_lea.vmem [#allocation5], %s465
        // Predicated region
        $region45: #{tpu_custom_call.1} parent=39 // pred_check
          %p467 = pneg %p166
        $region46: #{tpu_custom_call.1} parent=39 // pred_check_branch
          %469 = sbr.rel (%p467) target = $region48
        $region47: #{tpu_custom_call.1} parent=39 // pred_region
          %s471 = ssub.s32 256, 256
          %472 = vsyncadd %s463, %s471
          %s473 = smul.addr %s26, 4
          %s474 = sadd.s32 %s27, %s473
          %s475 = smul.addr %s474, 128
          %s476 = scalar_lea.hbm %s5, %s475
          %s477 = sshll.u32 %s466, 4
          %s478 = int_to_ptr.vmem [resolvable:$true] %s477
          %483 = dma.vmem_to_hbm [thread:$0]  %s478, 256, %s476, %s463, 128, 256, 8
        $region48: #{tpu_custom_call.1} parent=39 // pred_fallthru
          _
      $region40: #{tpu_custom_call.1} parent=5 // pred_fallthru
        _
      %p484 = scmp.le.s32.totalorder 2, %s17
      // Predicated region
      $region49: #{tpu_custom_call.1} parent=5 // pred_check
        %p485 = pneg %p484
      $region50: #{tpu_custom_call.1} parent=5 // pred_check_branch
        %487 = sbr.rel (%p485) target = $region52
      $region51: #{tpu_custom_call.1} parent=5 // pred_region
        %s488 = ssub.s32 %s17, 2
        // Predicated region
        $region53: #{tpu_custom_call.1} parent=51 // pred_check
          %p489 = pneg %p172
        $region54: #{tpu_custom_call.1} parent=51 // pred_check_branch
          %491 = sbr.rel (%p489) target = $region56
        $region55: #{tpu_custom_call.1} parent=51 // pred_region
          %s492 = sand.u32 %s157, 1
          %s493 = scalar_lea.sflag [#allocation4], %s492
          %s494 = sand.u32 %s157, 1
          %s495 = smul.addr %s494, 16
          %s496 = scalar_lea.vmem [#allocation5], %s495
          %497 = dma.done %s493, 256
        $region56: #{tpu_custom_call.1} parent=51 // pred_fallthru
          _
      $region52: #{tpu_custom_call.1} parent=5 // pred_fallthru
        _
    $region6: #{tpu_custom_call.1} parent=1 // loop_footer
      %s21 = sadd.s32 1, %s17
    $region7: #{tpu_custom_call.1} parent=1 // loop_footer_branch
      %16 = sbr.rel target = $region3
    $region8: #{tpu_custom_call.1} parent=1 // loop_exit
      _
    %498 = vsyncpa [#allocation3], 1
    %s499 = scalar_lea.sflag [#allocation3], 1
    %500 = vsyncpa %s499, 1
    %501 = vsyncpa [#allocation4], 1
    %s502 = scalar_lea.sflag [#allocation4], 1
    %503 = vsyncpa %s502, 1

</llo_original>
